<compile_context>
chip_gen: v5e
topology: v5e:2x2
jax: 0.10.0
libtpu: 0.0.40
codegen_flags: <defaults>
</compile_context>

<pallas_src>
import math
import functools

import jax
import jax.numpy as jnp
from jax.experimental import pallas as pl
from jax.experimental.pallas import tpu as pltpu


def _round_up(a, b):
    return (a + b - 1) // b * b


def _round_down(a, b):
    return a // b * b


def _cdiv(a, b):
    return (a + b - 1) // b


def _vmem_capacity_bytes():
    """Physical VMEM per TensorCore; conservative 64 MiB (v7x-sized) fallback."""
    try:
        return int(pltpu.get_tpu_info().vmem_capacity_bytes)
    except Exception:
        return 64 * 1024 * 1024


def _toroidal_kernel(x_ref, w1t_ref, b1_ref, w2c_ref, w2s_ref, b2_ref, o_ref):
    # x_ref:   (tm, D_in)        streamed activation tile
    # w1t_ref: (D_in, T)         input_proj weight^T, pre-scaled by 2*pi/periods
    # b1_ref:  (1, T)            input_proj bias,     pre-scaled by 2*pi/periods
    # w2c_ref: (T, D_out[_pad])  output_proj weight^T, even columns (multiplies cos)
    # w2s_ref: (T, D_out[_pad])  output_proj weight^T, odd columns  (multiplies sin)
    # b2_ref:  (1, D_out[_pad])
    # o_ref:   (tm, D_out[_pad])
    x = x_ref[...].astype(jnp.float32)
    phases = jnp.dot(x, w1t_ref[...], preferred_element_type=jnp.float32) + b1_ref[...]
    # Two tiny-K MXU passes instead of concatenate([cos, sin]) + one pass: the extra matmul
    # is essentially free (MXU far from saturated) and avoids a lane roll/select relayout.
    out = (jnp.dot(jnp.cos(phases), w2c_ref[...], preferred_element_type=jnp.float32)
           + jnp.dot(jnp.sin(phases), w2s_ref[...], preferred_element_type=jnp.float32)
           + b2_ref[...])
    # TODO(synk): with tiny num_tori (e.g. 4) the phases/cos/sin stage is only 4/128-lane
    # dense; on v7x (3.2 TB/s HBM) packing several row groups into the lanes before the
    # transcendentals is a possible further win (benchmark-gated).
    o_ref[...] = out.astype(o_ref.dtype)


@functools.partial(jax.jit, static_argnames=("tm", "stream_bf16"))
def toroidal_layer(x, params, tm=None, stream_bf16=False):
    """x: (..., input_dim). Returns (..., output_dim), matching the PyTorch forward."""
    w1 = params["w1"]            # (num_tori, input_dim)
    b1 = params["b1"]            # (num_tori,)
    w2 = params["w2"]            # (output_dim, 2*num_tori)
    b2 = params["b2"]            # (output_dim,)
    periods = params["periods"]  # (num_tori,)

    num_tori, input_dim = w1.shape
    output_dim = w2.shape[0]

    lead_shape = x.shape[:-1]
    stream_dtype = jnp.bfloat16 if stream_bf16 else jnp.float32
    out_dtype = stream_dtype
    x_flat = x.reshape(-1, input_dim)
    if x_flat.dtype != stream_dtype:
        x_flat = x_flat.astype(stream_dtype)
    M = x_flat.shape[0]

    # --- Lane-dense output only when it is nearly free: pad D_out to a multiple of 128
    #     only if output_dim >= 128 and the padding adds < 15% extra writeback.
    d_out_k = output_dim
    if output_dim >= 128:
        cand = _round_up(output_dim, 128)
        if (cand - output_dim) * 100 < 15 * output_dim:
            d_out_k = cand

    # --- Parameter-side constant folds (done once, outside the kernel). ---
    invp = (2.0 * math.pi / periods.astype(jnp.float32)).reshape(1, num_tori)
    w1t_scaled = jnp.transpose(w1).astype(jnp.float32) * invp          # (D_in, T)
    b1_scaled = b1.reshape(1, num_tori).astype(jnp.float32) * invp     # (1, T)
    w2c = jnp.transpose(w2[:, 0::2]).astype(jnp.float32)               # (T, D_out) <- cos
    w2s = jnp.transpose(w2[:, 1::2]).astype(jnp.float32)               # (T, D_out) <- sin
    b2_r = b2.reshape(1, output_dim).astype(jnp.float32)
    if d_out_k != output_dim:
        pad = ((0, 0), (0, d_out_k - output_dim))
        w2c, w2s, b2_r = jnp.pad(w2c, pad), jnp.pad(w2s, pad), jnp.pad(b2_r, pad)

    # --- Row tile derived from per-row footprint and chip VMEM (auto-derates for big dims). ---
    x_isz = jnp.dtype(stream_dtype).itemsize
    o_isz = jnp.dtype(out_dtype).itemsize
    w_bytes = 4 * (input_dim * num_tori + num_tori + 2 * num_tori * d_out_k + d_out_k)
    vmem_cap = _vmem_capacity_bytes()
    usable = max(vmem_cap - 16 * 1024 * 1024, 8 * 1024 * 1024)   # headroom for compiler scratch
    per_row = 2 * (x_isz * input_dim + o_isz * d_out_k)          # double-buffered x + out, per row
    tile_budget = max(usable - 2 * w_bytes, per_row * 8)
    if tm is None:
        tm_eff = max(8, min(_round_down(tile_budget // per_row, 8), 2048))
    else:
        tm_eff = max(8, _round_up(int(tm), 8))
    # Keep >= 2 grid iterations so ("parallel",) can split rows across both v7x TensorCores.
    tm_eff = min(tm_eff, _round_up(_cdiv(M, 2), 8))
    if M < 8:
        tm_eff = M   # block equal to the (tiny) full row dim is always a legal block shape
    grid = (_cdiv(M, tm_eff),)

    # --- VMEM request from actual footprint; never ask for all of v7x's 64 MiB. ---
    footprint = 2 * tm_eff * (x_isz * input_dim + o_isz * d_out_k) + 2 * w_bytes
    vmem_limit = int(min(max(32 * 1024 * 1024, footprint + 4 * 1024 * 1024), usable))

    cost = pl.CostEstimate(
        flops=int(2 * M * num_tori * (input_dim + 2 * d_out_k)),
        transcendentals=int(2 * M * num_tori),
        bytes_accessed=int(M * (x_isz * input_dim + o_isz * d_out_k) + w_bytes),
    )

    out_flat = pl.pallas_call(
        _toroidal_kernel,
        out_shape=jax.ShapeDtypeStruct((M, d_out_k), out_dtype),
        grid_spec=pltpu.PrefetchScalarGridSpec(
            num_scalar_prefetch=0,
            grid=grid,
            in_specs=[
                pl.BlockSpec((tm_eff, input_dim), lambda i: (i, 0)),
                pl.BlockSpec((input_dim, num_tori), lambda i: (0, 0)),
                pl.BlockSpec((1, num_tori), lambda i: (0, 0)),
                pl.BlockSpec((num_tori, d_out_k), lambda i: (0, 0)),
                pl.BlockSpec((num_tori, d_out_k), lambda i: (0, 0)),
                pl.BlockSpec((1, d_out_k), lambda i: (0, 0)),
            ],
            out_specs=pl.BlockSpec((tm_eff, d_out_k), lambda i: (i, 0)),
        ),
        compiler_params=pltpu.CompilerParams(
            dimension_semantics=("parallel",),
            vmem_limit_bytes=vmem_limit,
        ),
        cost_estimate=cost,
    )(x_flat, w1t_scaled, b1_scaled, w2c, w2s, b2_r)

    out = out_flat
    if d_out_k != output_dim:
        out = out[:, :output_dim]
    return out.reshape(*lead_shape, output_dim)


def init_params(key, input_dim, output_dim, num_tori=4):
    """Deterministic init mirroring the PyTorch module's parameter shapes."""
    torus_dim = 2 * num_tori
    base_periods = [10, 100, 24, 60, 7, 365, 12, 1000][:num_tori]
    base_periods += [1000] * (num_tori - len(base_periods))

    k1, k2, k3, k4 = jax.random.split(key, 4)
    bound1 = 1.0 / math.sqrt(input_dim)
    bound2 = 1.0 / math.sqrt(torus_dim)
    return {
        "periods": jnp.asarray(base_periods, dtype=jnp.float32),
        "w1": jax.random.uniform(k1, (num_tori, input_dim), jnp.float32, -bound1, bound1),
        "b1": jax.random.uniform(k2, (num_tori,), jnp.float32, -bound1, bound1),
        "w2": jax.random.uniform(k3, (output_dim, torus_dim), jnp.float32, -bound2, bound2),
        "b2": jax.random.uniform(k4, (output_dim,), jnp.float32, -bound2, bound2),
    }


def _reference(x, params):
    """Pure-JAX reference matching the PyTorch forward exactly."""
    w1, b1, w2, b2, periods = (
        params["w1"], params["b1"], params["w2"], params["b2"], params["periods"]
    )
    torus_values = x @ w1.T + b1
    phases = 2.0 * math.pi * torus_values / periods.reshape(1, -1)
    cos_vals = jnp.cos(phases)
    sin_vals = jnp.sin(phases)
    torus_dim = 2 * w1.shape[0]
    coords = jnp.zeros((*x.shape[:-1], torus_dim), jnp.float32)
    coords = coords.at[..., 0::2].set(cos_vals)
    coords = coords.at[..., 1::2].set(sin_vals)
    return coords @ w2.T + b2


if __name__ == "__main__":
    input_dim, output_dim, num_tori = 32, 32, 4
    batch, seq = 2, 8

    key = jax.random.PRNGKey(0)
    kx, kp = jax.random.split(key)
    x = jax.random.normal(kx, (batch, seq, input_dim), dtype=jnp.float32)
    params = init_params(kp, input_dim, output_dim, num_tori)

    out = jax.block_until_ready(toroidal_layer(x, params))
    ref = _reference(x, params)
    assert out.shape == (batch, seq, output_dim)
    assert jnp.allclose(out, ref, atol=1e-4, rtol=1e-4), "mismatch vs reference"

    # Exercise the ragged-M path (M = 15, not a multiple of the row tile).
    x2 = jax.random.normal(jax.random.PRNGKey(1), (3, 5, input_dim), dtype=jnp.float32)
    out2 = jax.block_until_ready(toroidal_layer(x2, params))
    ref2 = _reference(x2, params)
    assert out2.shape == (3, 5, output_dim)
    assert jnp.allclose(out2, ref2, atol=1e-4, rtol=1e-4), "mismatch vs reference (ragged M)"

    print("KERNEL_OK")
</pallas_src>

<mosaic_0001>
module attributes {stable_mosaic.version = 11 : i64} {
  func.func @_toroidal_kernel(%arg0: i32, %arg1: memref<8x32xf32, #tpu.memory_space<vmem>>, %arg2: memref<32x4xf32, #tpu.memory_space<vmem>>, %arg3: memref<1x4xf32, #tpu.memory_space<vmem>>, %arg4: memref<4x32xf32, #tpu.memory_space<vmem>>, %arg5: memref<4x32xf32, #tpu.memory_space<vmem>>, %arg6: memref<1x32xf32, #tpu.memory_space<vmem>>, %arg7: memref<8x32xf32, #tpu.memory_space<vmem>>) attributes {dimension_semantics = [#tpu.dimension_semantics<parallel>], iteration_bounds = array<i64: 2>, scalar_prefetch = 0 : i64, scratch_operands = 0 : i64, tpu.core_type = #tpu.core_type<tc>, window_params = [{transform_indices = @transform_0, window_bounds = array<i64: 8, 32>}, {pipeline_mode = #tpu.pipeline_mode<synchronous>, transform_indices = @transform_1, window_bounds = array<i64: 32, 4>}, {pipeline_mode = #tpu.pipeline_mode<synchronous>, transform_indices = @transform_2, window_bounds = array<i64: 1, 4>}, {pipeline_mode = #tpu.pipeline_mode<synchronous>, transform_indices = @transform_3, window_bounds = array<i64: 4, 32>}, {pipeline_mode = #tpu.pipeline_mode<synchronous>, transform_indices = @transform_4, window_bounds = array<i64: 4, 32>}, {pipeline_mode = #tpu.pipeline_mode<synchronous>, transform_indices = @transform_5, window_bounds = array<i64: 1, 32>}, {transform_indices = @transform_6, window_bounds = array<i64: 8, 32>}]} {
    %c0 = arith.constant 0 : index
    %c0_0 = arith.constant 0 : index
    %0 = vector.load %arg1[%c0, %c0_0] : memref<8x32xf32, #tpu.memory_space<vmem>>, vector<8x32xf32>
    %c0_1 = arith.constant 0 : index
    %c0_2 = arith.constant 0 : index
    %1 = vector.load %arg2[%c0_1, %c0_2] : memref<32x4xf32, #tpu.memory_space<vmem>>, vector<32x4xf32>
    %cst = arith.constant dense<0.000000e+00> : vector<8x4xf32>
    %2 = tpu.matmul %0, %1, %cst {dimension_numbers = #tpu.dot_dimension_numbers<[1], [0], [0], [1], [0, 0, 1, 1], [], []>} : vector<8x32xf32>, vector<32x4xf32>, vector<8x4xf32> -> vector<8x4xf32>
    %c0_3 = arith.constant 0 : index
    %c0_4 = arith.constant 0 : index
    %3 = vector.load %arg3[%c0_3, %c0_4] : memref<1x4xf32, #tpu.memory_space<vmem>>, vector<1x4xf32>
    %4 = vector.broadcast %3 : vector<1x4xf32> to vector<8x4xf32>
    %5 = arith.addf %2, %4 : vector<8x4xf32>
    %6 = math.cos %5 : vector<8x4xf32>
    %c0_5 = arith.constant 0 : index
    %c0_6 = arith.constant 0 : index
    %7 = vector.load %arg4[%c0_5, %c0_6] : memref<4x32xf32, #tpu.memory_space<vmem>>, vector<4x32xf32>
    %cst_7 = arith.constant dense<0.000000e+00> : vector<8x32xf32>
    %8 = tpu.matmul %6, %7, %cst_7 {dimension_numbers = #tpu.dot_dimension_numbers<[1], [0], [0], [1], [0, 0, 1, 1], [], []>} : vector<8x4xf32>, vector<4x32xf32>, vector<8x32xf32> -> vector<8x32xf32>
    %9 = math.sin %5 : vector<8x4xf32>
    %c0_8 = arith.constant 0 : index
    %c0_9 = arith.constant 0 : index
    %10 = vector.load %arg5[%c0_8, %c0_9] : memref<4x32xf32, #tpu.memory_space<vmem>>, vector<4x32xf32>
    %cst_10 = arith.constant dense<0.000000e+00> : vector<8x32xf32>
    %11 = tpu.matmul %9, %10, %cst_10 {dimension_numbers = #tpu.dot_dimension_numbers<[1], [0], [0], [1], [0, 0, 1, 1], [], []>} : vector<8x4xf32>, vector<4x32xf32>, vector<8x32xf32> -> vector<8x32xf32>
    %12 = arith.addf %8, %11 : vector<8x32xf32>
    %c0_11 = arith.constant 0 : index
    %c0_12 = arith.constant 0 : index
    %13 = vector.load %arg6[%c0_11, %c0_12] : memref<1x32xf32, #tpu.memory_space<vmem>>, vector<1x32xf32>
    %14 = vector.broadcast %13 : vector<1x32xf32> to vector<8x32xf32>
    %15 = arith.addf %12, %14 : vector<8x32xf32>
    %c0_13 = arith.constant 0 : index
    %c0_14 = arith.constant 0 : index
    %16 = vector.load %arg7[%c0_13, %c0_14] : memref<8x32xf32, #tpu.memory_space<vmem>>, vector<8x32xf32>
    tpu.vector_store %arg7[%c0_13, %c0_14], %15 {strides = array<i32>} : memref<8x32xf32, #tpu.memory_space<vmem>>, vector<8x32xf32>,
    return
  }
  func.func @transform_0(%arg0: i32) -> (i32, i32) {
    %c0_i32 = arith.constant 0 : i32
    %c0_i32_0 = arith.constant 0 : i32
    return %arg0, %c0_i32 : i32, i32
  }
  func.func @transform_1(%arg0: i32) -> (i32, i32) {
    %c0_i32 = arith.constant 0 : i32
    %c0_i32_0 = arith.constant 0 : i32
    %c0_i32_1 = arith.constant 0 : i32
    return %c0_i32, %c0_i32_0 : i32, i32
  }
  func.func @transform_2(%arg0: i32) -> (i32, i32) {
    %c0_i32 = arith.constant 0 : i32
    %c0_i32_0 = arith.constant 0 : i32
    %c0_i32_1 = arith.constant 0 : i32
    return %c0_i32, %c0_i32_0 : i32, i32
  }
  func.func @transform_3(%arg0: i32) -> (i32, i32) {
    %c0_i32 = arith.constant 0 : i32
    %c0_i32_0 = arith.constant 0 : i32
    %c0_i32_1 = arith.constant 0 : i32
    return %c0_i32, %c0_i32_0 : i32, i32
  }
  func.func @transform_4(%arg0: i32) -> (i32, i32) {
    %c0_i32 = arith.constant 0 : i32
    %c0_i32_0 = arith.constant 0 : i32
    %c0_i32_1 = arith.constant 0 : i32
    return %c0_i32, %c0_i32_0 : i32, i32
  }
  func.func @transform_5(%arg0: i32) -> (i32, i32) {
    %c0_i32 = arith.constant 0 : i32
    %c0_i32_0 = arith.constant 0 : i32
    %c0_i32_1 = arith.constant 0 : i32
    return %c0_i32, %c0_i32_0 : i32, i32
  }
  func.func @transform_6(%arg0: i32) -> (i32, i32) {
    %c0_i32 = arith.constant 0 : i32
    %c0_i32_0 = arith.constant 0 : i32
    return %arg0, %c0_i32 : i32, i32
  }
}

</mosaic_0001>

<llo_original>
// kernel: toroidal_layer.1
$region0: #{toroidal_layer.1}
  #allocation0 [shape = 'u32[]', space=smem, size = 0x4, offset = 0x4, fixed_abs, tag = 'smem constant byte address 0x4 - core index']
  #allocation1 [shape = 'u32[72,128]{1,0:T(1,128)}', space=vmem, size = 0x9000, scoped, tag = 'internal scratch']
  %s0 = inlined_call_operand.vmem [shape: f32[16,32], index: 0, kind: input, shape index: {}]
  %s1 = inlined_call_operand.vmem [shape: f32[32,4], index: 1, kind: input, shape index: {}]
  %s2 = inlined_call_operand.vmem [shape: f32[1,4], index: 2, kind: input, shape index: {}]
  %s3 = inlined_call_operand.vmem [shape: f32[4,32], index: 3, kind: input, shape index: {}]
  %s4 = inlined_call_operand.vmem [shape: f32[4,32], index: 4, kind: input, shape index: {}]
  %s5 = inlined_call_operand.vmem [shape: f32[1,32], index: 5, kind: input, shape index: {}]
  %s6 = inlined_call_operand.hbm [shape: f32[16,32], index: 6, kind: output, shape index: {}]
  %s7 = sld [smem:[#allocation0]]
  $region57: #{toroidal_layer.1} parent=0
    _
  %s9 = ssub.s32 1, %s7
  %s10 = scalar_select 0, %s9, %s7
  $region1: #{toroidal_layer.1} parent=0
    #allocation2 [shape = 'u8[8192]{0}', space=vmem, size = 0x2000, scoped, tag = 'output window, operand 0']
    #allocation3 [shape = 's32[2]{0}', space=sflag, size = 0x8, scoped, tag = 'scoped memory for toroidal_layer.1']
    %11 = vsyncpa [#allocation3], 0
    %s12 = scalar_lea.sflag [#allocation3], 1
    %13 = vsyncpa %s12, 0
    loop: start=0, step=1, limit=4
    $region2: #{toroidal_layer.1} parent=1 // loop_pre_header
      _
    $region3: #{toroidal_layer.1} parent=1 // loop_header
      %s15 = sphi 0, %s19
      %p16 = scmp.ge.s32.totalorder %s15, 4
      %s25 = sphi 0, %s27
      %s28 = sphi 0, %s25
      %s29 = sphi 0, %s28
      %s45 = sphi 0, %s29
      %s49 = sphi 0, %s49
      %s51 = sphi 0, %s49
      %s52 = sphi 0, %s51
      %s66 = sphi 0, %s52
      %s70 = sphi 0, %s70
      %s72 = sphi 0, %s70
      %s73 = sphi 0, %s72
      %s87 = sphi 0, %s73
      %s91 = sphi 0, %s91
      %s93 = sphi 0, %s91
      %s94 = sphi 0, %s93
      %s108 = sphi 0, %s94
      %s112 = sphi 0, %s112
      %s114 = sphi 0, %s112
      %s115 = sphi 0, %s114
      %s129 = sphi 0, %s115
      %s133 = sphi 0, %s133
      %s135 = sphi 0, %s133
      %s136 = sphi 0, %s135
      %s150 = sphi 0, %s136
      %s156 = sphi 0, %s158
      %s159 = sphi 0, %s156
      %s160 = sphi 0, %s159
      %s176 = sphi 0, %s160
    $region4: #{toroidal_layer.1} parent=1 // loop_header_branch
      %18 = sbr.rel (%p16) target = $region8
    $region5: #{toroidal_layer.1} parent=1 // loop_body
      %s20 = ssub.s32 %s15, 1
      %s21 = ssub.s32 %s15, 2
      %s22 = sadd.s32 %s15, 1
      %s23 = ssub.s32 %s15, %s22
      %p24 = scmp.eq.s32.totalorder %s23, 0
      %s26 = sadd.s32 %s25, 1
      %s27 = scalar_select %p24, %s25, %s26
      %p30 = pneg %p24
      %p31 = scmp.eq.s32.totalorder %s15, 1
      %p32 = por %p30, %p31
      %p33 = scmp.ne.s32.totalorder %s25, %s28
      %p34 = scmp.eq.s32.totalorder %s15, 0
      %p35 = por %p33, %p34
      %p36 = scmp.ne.s32.totalorder %s25, %s28
      %p37 = scmp.eq.s32.totalorder %s20, 1
      %p38 = por %p36, %p37
      %p39 = scmp.ne.s32.totalorder %s28, %s29
      %p40 = scmp.eq.s32.totalorder %s20, 0
      %p41 = por %p39, %p40
      %p42 = scmp.ne.s32.totalorder %s28, %s29
      %p43 = scmp.eq.s32.totalorder %s21, 1
      %p44 = por %p42, %p43
      %p46 = scmp.ne.s32.totalorder %s29, %s45
      %p47 = scmp.eq.s32.totalorder %s21, 0
      %p48 = por %p46, %p47
      %s50 = sadd.s32 %s49, 1
      %p53 = scmp.eq.s32.totalorder %s15, 1
      %p54 = scmp.ne.s32.totalorder %s49, %s51
      %p55 = scmp.eq.s32.totalorder %s15, 0
      %p56 = por %p54, %p55
      %p57 = scmp.ne.s32.totalorder %s49, %s51
      %p58 = scmp.eq.s32.totalorder %s20, 1
      %p59 = por %p57, %p58
      %p60 = scmp.ne.s32.totalorder %s51, %s52
      %p61 = scmp.eq.s32.totalorder %s20, 0
      %p62 = por %p60, %p61
      %p63 = scmp.ne.s32.totalorder %s51, %s52
      %p64 = scmp.eq.s32.totalorder %s21, 1
      %p65 = por %p63, %p64
      %p67 = scmp.ne.s32.totalorder %s52, %s66
      %p68 = scmp.eq.s32.totalorder %s21, 0
      %p69 = por %p67, %p68
      %s71 = sadd.s32 %s70, 1
      %p74 = scmp.eq.s32.totalorder %s15, 1
      %p75 = scmp.ne.s32.totalorder %s70, %s72
      %p76 = scmp.eq.s32.totalorder %s15, 0
      %p77 = por %p75, %p76
      %p78 = scmp.ne.s32.totalorder %s70, %s72
      %p79 = scmp.eq.s32.totalorder %s20, 1
      %p80 = por %p78, %p79
      %p81 = scmp.ne.s32.totalorder %s72, %s73
      %p82 = scmp.eq.s32.totalorder %s20, 0
      %p83 = por %p81, %p82
      %p84 = scmp.ne.s32.totalorder %s72, %s73
      %p85 = scmp.eq.s32.totalorder %s21, 1
      %p86 = por %p84, %p85
      %p88 = scmp.ne.s32.totalorder %s73, %s87
      %p89 = scmp.eq.s32.totalorder %s21, 0
      %p90 = por %p88, %p89
      %s92 = sadd.s32 %s91, 1
      %p95 = scmp.eq.s32.totalorder %s15, 1
      %p96 = scmp.ne.s32.totalorder %s91, %s93
      %p97 = scmp.eq.s32.totalorder %s15, 0
      %p98 = por %p96, %p97
      %p99 = scmp.ne.s32.totalorder %s91, %s93
      %p100 = scmp.eq.s32.totalorder %s20, 1
      %p101 = por %p99, %p100
      %p102 = scmp.ne.s32.totalorder %s93, %s94
      %p103 = scmp.eq.s32.totalorder %s20, 0
      %p104 = por %p102, %p103
      %p105 = scmp.ne.s32.totalorder %s93, %s94
      %p106 = scmp.eq.s32.totalorder %s21, 1
      %p107 = por %p105, %p106
      %p109 = scmp.ne.s32.totalorder %s94, %s108
      %p110 = scmp.eq.s32.totalorder %s21, 0
      %p111 = por %p109, %p110
      %s113 = sadd.s32 %s112, 1
      %p116 = scmp.eq.s32.totalorder %s15, 1
      %p117 = scmp.ne.s32.totalorder %s112, %s114
      %p118 = scmp.eq.s32.totalorder %s15, 0
      %p119 = por %p117, %p118
      %p120 = scmp.ne.s32.totalorder %s112, %s114
      %p121 = scmp.eq.s32.totalorder %s20, 1
      %p122 = por %p120, %p121
      %p123 = scmp.ne.s32.totalorder %s114, %s115
      %p124 = scmp.eq.s32.totalorder %s20, 0
      %p125 = por %p123, %p124
      %p126 = scmp.ne.s32.totalorder %s114, %s115
      %p127 = scmp.eq.s32.totalorder %s21, 1
      %p128 = por %p126, %p127
      %p130 = scmp.ne.s32.totalorder %s115, %s129
      %p131 = scmp.eq.s32.totalorder %s21, 0
      %p132 = por %p130, %p131
      %s134 = sadd.s32 %s133, 1
      %p137 = scmp.eq.s32.totalorder %s15, 1
      %p138 = scmp.ne.s32.totalorder %s133, %s135
      %p139 = scmp.eq.s32.totalorder %s15, 0
      %p140 = por %p138, %p139
      %p141 = scmp.ne.s32.totalorder %s133, %s135
      %p142 = scmp.eq.s32.totalorder %s20, 1
      %p143 = por %p141, %p142
      %p144 = scmp.ne.s32.totalorder %s135, %s136
      %p145 = scmp.eq.s32.totalorder %s20, 0
      %p146 = por %p144, %p145
      %p147 = scmp.ne.s32.totalorder %s135, %s136
      %p148 = scmp.eq.s32.totalorder %s21, 1
      %p149 = por %p147, %p148
      %p151 = scmp.ne.s32.totalorder %s136, %s150
      %p152 = scmp.eq.s32.totalorder %s21, 0
      %p153 = por %p151, %p152
      %s154 = ssub.s32 %s15, %s22
      %p155 = scmp.eq.s32.totalorder %s154, 0
      %s157 = sadd.s32 %s156, 1
      %s158 = scalar_select %p155, %s156, %s157
      %p161 = pneg %p155
      %p162 = scmp.eq.s32.totalorder %s15, 1
      %p163 = por %p161, %p162
      %p164 = scmp.ne.s32.totalorder %s156, %s159
      %p165 = scmp.eq.s32.totalorder %s15, 0
      %p166 = por %p164, %p165
      %p167 = scmp.ne.s32.totalorder %s156, %s159
      %p168 = scmp.eq.s32.totalorder %s20, 1
      %p169 = por %p167, %p168
      %p170 = scmp.ne.s32.totalorder %s159, %s160
      %p171 = scmp.eq.s32.totalorder %s20, 0
      %p172 = por %p170, %p171
      %p173 = scmp.ne.s32.totalorder %s159, %s160
      %p174 = scmp.eq.s32.totalorder %s21, 1
      %p175 = por %p173, %p174
      %p177 = scmp.ne.s32.totalorder %s160, %s176
      %p178 = scmp.eq.s32.totalorder %s21, 0
      %p179 = por %p177, %p178
      %p180 = scmp.le.s32.totalorder 1, %s15
      %p181 = scmp.lt.s32.totalorder %s15, 3
      %p182 = pnand %p180, %p181
      %p183 = pneg %p182
      // Predicated region
      $region9: #{toroidal_layer.1} parent=5 // pred_check
        _
      $region10: #{toroidal_layer.1} parent=5 // pred_check_branch
        %185 = sbr.rel (%p182) target = $region12
      $region11: #{toroidal_layer.1} parent=5 // pred_region
        %s186 = ssub.s32 %s15, 1
        // Predicated region
        $region13: #{toroidal_layer.1} parent=11 // pred_check
          %p187 = pneg %p62
        $region14: #{toroidal_layer.1} parent=11 // pred_check_branch
          %189 = sbr.rel (%p187) target = $region16
        $region15: #{toroidal_layer.1} parent=11 // pred_region
          _
        $region16: #{toroidal_layer.1} parent=11 // pred_fallthru
          _
        // Predicated region
        $region17: #{toroidal_layer.1} parent=11 // pred_check
          %p190 = pneg %p83
        $region18: #{toroidal_layer.1} parent=11 // pred_check_branch
          %192 = sbr.rel (%p190) target = $region20
        $region19: #{toroidal_layer.1} parent=11 // pred_region
          _
        $region20: #{toroidal_layer.1} parent=11 // pred_fallthru
          _
        // Predicated region
        $region21: #{toroidal_layer.1} parent=11 // pred_check
          %p193 = pneg %p104
        $region22: #{toroidal_layer.1} parent=11 // pred_check_branch
          %195 = sbr.rel (%p193) target = $region24
        $region23: #{toroidal_layer.1} parent=11 // pred_region
          _
        $region24: #{toroidal_layer.1} parent=11 // pred_fallthru
          _
        // Predicated region
        $region25: #{toroidal_layer.1} parent=11 // pred_check
          %p196 = pneg %p125
        $region26: #{toroidal_layer.1} parent=11 // pred_check_branch
          %198 = sbr.rel (%p196) target = $region28
        $region27: #{toroidal_layer.1} parent=11 // pred_region
          _
        $region28: #{toroidal_layer.1} parent=11 // pred_fallthru
          _
        // Predicated region
        $region29: #{toroidal_layer.1} parent=11 // pred_check
          %p199 = pneg %p146
        $region30: #{toroidal_layer.1} parent=11 // pred_check_branch
          %201 = sbr.rel (%p199) target = $region32
        $region31: #{toroidal_layer.1} parent=11 // pred_region
          _
        $region32: #{toroidal_layer.1} parent=11 // pred_fallthru
          _
      $region12: #{toroidal_layer.1} parent=5 // pred_fallthru
        _
      %p202 = scmp.lt.s32.totalorder %s15, 2
      // Predicated region
      $region33: #{toroidal_layer.1} parent=5 // pred_check
        %p203 = pneg %p202
      $region34: #{toroidal_layer.1} parent=5 // pred_check_branch
        %205 = sbr.rel (%p203) target = $region36
      $region35: #{toroidal_layer.1} parent=5 // pred_region
        // Predicated region
        $region37: #{toroidal_layer.1} parent=35 // pred_check
          %p206 = pneg %p35
        $region38: #{toroidal_layer.1} parent=35 // pred_check_branch
          %208 = sbr.rel (%p206) target = $region40
        $region39: #{toroidal_layer.1} parent=35 // pred_region
          %p209 = scmp.lt.s32.totalorder %s15, 1
          %s210 = scalar_select %p209, %s15, 1
          %s211 = smul.addr %s210, 8
          %s212 = scalar_lea.vmem %s0, %s211
        $region40: #{toroidal_layer.1} parent=35 // pred_fallthru
          _
      $region36: #{toroidal_layer.1} parent=5 // pred_fallthru
        _
      %p213 = scmp.le.s32.totalorder 1, %s15
      %p214 = scmp.lt.s32.totalorder %s15, 3
      %p215 = pnand %p213, %p214
      %p216 = pneg %p215
      // Predicated region
      $region41: #{toroidal_layer.1} parent=5 // pred_check
        _
      $region42: #{toroidal_layer.1} parent=5 // pred_check_branch
        %218 = sbr.rel (%p215) target = $region44
      $region43: #{toroidal_layer.1} parent=5 // pred_region
        %s219 = ssub.s32 %s15, 1
        %p220 = scmp.lt.s32.totalorder %s20, 1
        %s221 = scalar_select %p220, %s20, 1
        %s222 = smul.addr %s221, 8
        %s223 = scalar_lea.vmem %s0, %s222
        %p224 = pneg %p41
        %p225 = pneg %p38
        %p226 = pneg %p62
        %p227 = pneg %p59
        %p228 = pneg %p83
        %p229 = pneg %p80
        %p230 = pneg %p104
        %p231 = pneg %p101
        %p232 = pneg %p125
        %p233 = pneg %p122
        %p234 = pneg %p146
        %p235 = pneg %p143
        %p236 = pneg %p172
        %p237 = pneg %p169
        %s238 = sand.u32 %s159, 1
        %s239 = scalar_lea.sflag [#allocation3], %s238
        %s240 = sand.u32 %s159, 1
        %s241 = smul.addr %s240, 8
        %s242 = scalar_lea.vmem [#allocation2], %s241
        %p243 = scmp.lt.s32.totalorder %s20, 1
        %s244 = scalar_select %p243, %s20, 1
        %s245 = smul.addr %s244, 8
        %s246 = scalar_lea.vmem %s0, %s245
        %v247 = vld [vmem:[%s246] sm:$0xff]
        %v248 = vld [vmem:[%s1] sm:$0xff]
        %v249 = vld [vmem:[%s1 + $0x8] sm:$0xff]
        %v250 = vld [vmem:[%s1 + $0x10] sm:$0xff]
        %v251 = vld [vmem:[%s1 + $0x18] sm:$0xff]
        %v252 = vld [vmem:[%s2] sm:$0x1]
        %v254 = vperm.slane %v252, 0
        %vm256 = vcmask 261120
        %v258 = vsel %vm256, %v247, 0
        %260 = vmatpush.msra.mxu0 0.0
        %261 = vmatpush.msra.mxu0 0.0
        %262 = vmatpush.msra.mxu0 0.0
        %263 = vmatpush.msra.mxu0 0.0
        %264 = vmatpush.msra.mxu0 0.0
        %265 = vmatpush.msra.mxu0 0.0
        %266 = vmatpush.msra.mxu0 0.0
        %267 = vmatpush.msra.mxu0 0.0
        %268 = vmatpush.msra.mxu0 0.0
        %269 = vmatpush.msra.mxu0 0.0
        %270 = vmatpush.msra.mxu0 0.0
        %271 = vmatpush.msra.mxu0 0.0
        %272 = vmatpush.msra.mxu0 %v251
        %273 = vmatpush.msra.mxu0 %v250
        %274 = vmatpush.msra.mxu0 %v249
        %275 = vmatpush.msra.mxu0 %v248
        %276 = vmatmul.f32.gmra.mxu0 %v258
        %v277 = vpop.f32.mrf.mxu0
        %v278 = vadd.f32 %v254, %v277
        %279 = vdwg.mxu0
        %v280 = vand.u32 2147483647, %v278
        %vm281 = vcmp.le.f32.partialorder %v280, 0.7853982
        %vm282 = vcmp.lt.s32.totalorder %v278, 0
        %v283 = vand.u32 %v278, 2139095040
        %v284 = vshrl.u32 %v283, 23
        %v285 = vsub.s32 %v284, 127
        %v286 = vand.u32 2147483647, %v278
        %v287 = vand.u32 %v286, 8388607
        %v288 = vor.u32 %v287, 8388608
        %v289 = vsub.s32 0, %v288
        %v290 = vadd.s32 %v285, 1
        %vm291 = vcmp.gt.s32.totalorder %v290, 0
        %v292 = vsel %vm291, %v290, 0
        %v293 = vshrl.u32 %v292, 5
        %v294 = vand.u32 %v292, 31
        %v295 = vsub.s32 32, %v294
        %v296 = vshrl.u32 683565275, %v295
        %v297 = vshll.u32 683565275, %v294
        %v298 = vshrl.u32 2475754826, %v295
        %v299 = vor.u32 %v297, %v298
        %v300 = vshll.u32 2475754826, %v294
        %v301 = vshrl.u32 2131351028, %v295
        %v302 = vor.u32 %v300, %v301
        %v303 = vshll.u32 2131351028, %v294
        %v304 = vshrl.u32 2102212464, %v295
        %v305 = vor.u32 %v303, %v304
        %v306 = vshll.u32 2102212464, %v294
        %v307 = vshrl.u32 920167782, %v295
        %v308 = vor.u32 %v306, %v307
        %v309 = vshll.u32 920167782, %v294
        %v310 = vshrl.u32 1326507024, %v295
        %v311 = vor.u32 %v309, %v310
        %vm312 = vcmp.lt.s32.totalorder %v293, 1
        %vm313 = vcmp.lt.s32.totalorder %v293, 2
        %vm314 = vcmp.lt.s32.totalorder %v293, 3
        %vm315 = vcmp.lt.s32.totalorder %v293, 4
        %v316 = vsel %vm312, %v296, %v299
        %v317 = vsel %vm315, %v305, 2102212464
        %v318 = vsel %vm314, %v302, %v317
        %v319 = vsel %vm313, %v316, %v318
        %v320 = vsel %vm312, %v299, %v302
        %v321 = vsel %vm315, %v308, 920167782
        %v322 = vsel %vm314, %v305, %v321
        %v323 = vsel %vm313, %v320, %v322
        %v324 = vsel %vm312, %v302, %v305
        %v325 = vsel %vm315, %v311, 1326507024
        %v326 = vsel %vm314, %v308, %v325
        %v327 = vsel %vm313, %v324, %v326
        %v328 = vshll.u32 %v288, 8
        %v329 = vand.u32 %v328, 65535
        %v330 = vshrl.u32 %v328, 16
        %v331 = vand.u32 %v327, 65535
        %v332 = vshrl.u32 %v327, 16
        %v333 = vmul.u32 %v329, %v331
        %v334 = vmul.u32 %v329, %v332
        %v335 = vmul.u32 %v330, %v331
        %v336 = vmul.u32 %v330, %v332
        %v337 = vshll.u32 %v334, 16
        %v338 = vshrl.u32 %v334, 16
        %v339 = vshll.u32 %v335, 16
        %v340 = vshrl.u32 %v335, 16
        %vm341 = vc.u32 %v333, %v337
        %v342 = vsel %vm341, 1, 0
        %v343 = vadd.s32 %v333, %v337
        %v344 = vadd.s32 %v336, %v342
        %vm345 = vc.u32 %v343, %v339
        %v346 = vsel %vm345, 1, 0
        %v347 = vadd.s32 %v343, %v339
        %v348 = vadd.s32 %v344, %v346
        %v349 = vadd.s32 %v348, %v338
        %v350 = vadd.s32 %v349, %v340
        %v351 = vand.u32 %v328, 65535
        %v352 = vshrl.u32 %v328, 16
        %v353 = vand.u32 %v323, 65535
        %v354 = vshrl.u32 %v323, 16
        %v355 = vmul.u32 %v351, %v353
        %v356 = vmul.u32 %v351, %v354
        %v357 = vmul.u32 %v352, %v353
        %v358 = vmul.u32 %v352, %v354
        %v359 = vshll.u32 %v356, 16
        %v360 = vshrl.u32 %v356, 16
        %v361 = vshll.u32 %v357, 16
        %v362 = vshrl.u32 %v357, 16
        %vm363 = vc.u32 %v355, %v359
        %v364 = vsel %vm363, 1, 0
        %v365 = vadd.s32 %v355, %v359
        %v366 = vadd.s32 %v358, %v364
        %vm367 = vc.u32 %v365, %v361
        %v368 = vsel %vm367, 1, 0
        %v369 = vadd.s32 %v365, %v361
        %v370 = vadd.s32 %v366, %v368
        %v371 = vadd.s32 %v370, %v360
        %v372 = vadd.s32 %v371, %v362
        %v373 = vmul.u32 %v328, %v319
        %v374 = vadd.s32 %v350, %v369
        %vm375 = vc.u32 %v350, %v369
        %v376 = vadd.s32 %v372, 1
        %v377 = vsel %vm375, %v376, %v372
        %v378 = vadd.s32 %v373, %v377
        %v379 = vadd.s32 %v378, 536870912
        %v380 = vshrl.u32 %v379, 30
        %v381 = vshll.u32 %v380, 30
        %v382 = vsub.s32 %v378, %v381
        %vm383 = vcmp.lt.s32.totalorder %v382, 0
        %v384 = vsub.s32 0, %v382
        %v385 = vsel %vm383, %v384, %v382
        %v386 = vclz %v385
        %v387 = vsub.s32 %v386, 2
        %vm388 = vcmp.gt.s32.totalorder 0, %v387
        %v389 = vsel %vm388, 0, %v387
        %v390 = vsub.s32 32, %v389
        %v391 = vshll.u32 %v382, %v389
        %v392 = vshrl.u32 %v374, %v390
        %v393 = vor.u32 %v391, %v392
        %v394 = vsub.s32 4294967266, %v389
        %v395 = vadd.s32 %v394, 127
        %v396 = vshll.u32 %v395, 23
        %v397 = vor.u32 4788187, %v396
        %v398 = vand.u32 2147483647, %v397
        %v400 = vcvt.s32.f32 %v393
        %v401 = vmul.f32 %v400, %v398
        %v402 = vxor.u32 %v401, 2147483648
        %v403 = vsel %vm282, %v402, %v401
        %v404 = vsub.s32 4, %v380
        %v405 = vsel %vm282, %v404, %v380
        %v406 = vsel %vm281, %v278, %v403
        %v407 = vsel %vm281, 0, %v405
        %v408 = vmul.f32 %v406, %v406
        %v409 = vmul.f32 %v408, -0.001358992
        %v410 = vadd.f32 %v409, 0.041655596
        %v411 = vmul.f32 %v408, %v410
        %v412 = vadd.f32 %v411, -0.4999988
        %v413 = vmul.f32 %v408, %v412
        %v414 = vadd.f32 1.0, %v413
        %v415 = vmul.f32 %v406, %v406
        %v416 = vmul.f32 %v415, -0.00019511016
        %v417 = vadd.f32 %v416, 0.008332121
        %v418 = vmul.f32 %v415, %v417
        %v419 = vadd.f32 %v418, -0.16666654
        %v420 = vmul.f32 %v415, %v419
        %v421 = vadd.f32 %v420, 1.0
        %v422 = vmul.f32 %v421, %v406
        %vm423 = vweird.f32 %v278
        %v424 = vand.u32 %v407, 3
        %vm425 = vcmp.lt.s32.totalorder %v424, 2
        %vm426 = vcmp.eq.s32.totalorder %v424, 0
        %v427 = vxor.u32 %v422, 2147483648
        %v428 = vsel %vm426, %v414, %v427
        %vm429 = vcmp.eq.s32.totalorder %v424, 2
        %v430 = vxor.u32 %v414, 2147483648
        %v431 = vsel %vm429, %v430, %v422
        %v432 = vsel %vm425, %v428, %v431
        %v433 = vsel %vm423, nan, %v432
        %v434 = vld [vmem:[%s3] sm:$0xf]
        %v435 = vand.u32 2147483647, %v278
        %vm436 = vcmp.le.f32.partialorder %v435, 0.7853982
        %vm437 = vcmp.lt.s32.totalorder %v278, 0
        %v438 = vand.u32 %v278, 2139095040
        %v439 = vshrl.u32 %v438, 23
        %v440 = vsub.s32 %v439, 127
        %v441 = vand.u32 2147483647, %v278
        %v442 = vand.u32 %v441, 8388607
        %v443 = vor.u32 %v442, 8388608
        %v444 = vsub.s32 0, %v443
        %v445 = vadd.s32 %v440, 1
        %vm446 = vcmp.gt.s32.totalorder %v445, 0
        %v447 = vsel %vm446, %v445, 0
        %v448 = vshrl.u32 %v447, 5
        %v449 = vand.u32 %v447, 31
        %v450 = vsub.s32 32, %v449
        %v451 = vshrl.u32 683565275, %v450
        %v452 = vshll.u32 683565275, %v449
        %v453 = vshrl.u32 2475754826, %v450
        %v454 = vor.u32 %v452, %v453
        %v455 = vshll.u32 2475754826, %v449
        %v456 = vshrl.u32 2131351028, %v450
        %v457 = vor.u32 %v455, %v456
        %v458 = vshll.u32 2131351028, %v449
        %v459 = vshrl.u32 2102212464, %v450
        %v460 = vor.u32 %v458, %v459
        %v461 = vshll.u32 2102212464, %v449
        %v462 = vshrl.u32 920167782, %v450
        %v463 = vor.u32 %v461, %v462
        %v464 = vshll.u32 920167782, %v449
        %v465 = vshrl.u32 1326507024, %v450
        %v466 = vor.u32 %v464, %v465
        %vm467 = vcmp.lt.s32.totalorder %v448, 1
        %vm468 = vcmp.lt.s32.totalorder %v448, 2
        %vm469 = vcmp.lt.s32.totalorder %v448, 3
        %vm470 = vcmp.lt.s32.totalorder %v448, 4
        %v471 = vsel %vm467, %v451, %v454
        %v472 = vsel %vm470, %v460, 2102212464
        %v473 = vsel %vm469, %v457, %v472
        %v474 = vsel %vm468, %v471, %v473
        %v475 = vsel %vm467, %v454, %v457
        %v476 = vsel %vm470, %v463, 920167782
        %v477 = vsel %vm469, %v460, %v476
        %v478 = vsel %vm468, %v475, %v477
        %v479 = vsel %vm467, %v457, %v460
        %v480 = vsel %vm470, %v466, 1326507024
        %v481 = vsel %vm469, %v463, %v480
        %v482 = vsel %vm468, %v479, %v481
        %v483 = vshll.u32 %v443, 8
        %v484 = vand.u32 %v483, 65535
        %v485 = vshrl.u32 %v483, 16
        %v486 = vand.u32 %v482, 65535
        %v487 = vshrl.u32 %v482, 16
        %v488 = vmul.u32 %v484, %v486
        %v489 = vmul.u32 %v484, %v487
        %v490 = vmul.u32 %v485, %v486
        %v491 = vmul.u32 %v485, %v487
        %v492 = vshll.u32 %v489, 16
        %v493 = vshrl.u32 %v489, 16
        %v494 = vshll.u32 %v490, 16
        %v495 = vshrl.u32 %v490, 16
        %vm496 = vc.u32 %v488, %v492
        %v497 = vsel %vm496, 1, 0
        %v498 = vadd.s32 %v488, %v492
        %v499 = vadd.s32 %v491, %v497
        %vm500 = vc.u32 %v498, %v494
        %v501 = vsel %vm500, 1, 0
        %v502 = vadd.s32 %v498, %v494
        %v503 = vadd.s32 %v499, %v501
        %v504 = vadd.s32 %v503, %v493
        %v505 = vadd.s32 %v504, %v495
        %v506 = vand.u32 %v483, 65535
        %v507 = vshrl.u32 %v483, 16
        %v508 = vand.u32 %v478, 65535
        %v509 = vshrl.u32 %v478, 16
        %v510 = vmul.u32 %v506, %v508
        %v511 = vmul.u32 %v506, %v509
        %v512 = vmul.u32 %v507, %v508
        %v513 = vmul.u32 %v507, %v509
        %v514 = vshll.u32 %v511, 16
        %v515 = vshrl.u32 %v511, 16
        %v516 = vshll.u32 %v512, 16
        %v517 = vshrl.u32 %v512, 16
        %vm518 = vc.u32 %v510, %v514
        %v519 = vsel %vm518, 1, 0
        %v520 = vadd.s32 %v510, %v514
        %v521 = vadd.s32 %v513, %v519
        %vm522 = vc.u32 %v520, %v516
        %v523 = vsel %vm522, 1, 0
        %v524 = vadd.s32 %v520, %v516
        %v525 = vadd.s32 %v521, %v523
        %v526 = vadd.s32 %v525, %v515
        %v527 = vadd.s32 %v526, %v517
        %v528 = vmul.u32 %v483, %v474
        %v529 = vadd.s32 %v505, %v524
        %vm530 = vc.u32 %v505, %v524
        %v531 = vadd.s32 %v527, 1
        %v532 = vsel %vm530, %v531, %v527
        %v533 = vadd.s32 %v528, %v532
        %v534 = vadd.s32 %v533, 536870912
        %v535 = vshrl.u32 %v534, 30
        %v536 = vshll.u32 %v535, 30
        %v537 = vsub.s32 %v533, %v536
        %vm538 = vcmp.lt.s32.totalorder %v537, 0
        %v539 = vsub.s32 0, %v537
        %v540 = vsel %vm538, %v539, %v537
        %v541 = vclz %v540
        %v542 = vsub.s32 %v541, 2
        %vm543 = vcmp.gt.s32.totalorder 0, %v542
        %v544 = vsel %vm543, 0, %v542
        %v545 = vsub.s32 32, %v544
        %v546 = vshll.u32 %v537, %v544
        %v547 = vshrl.u32 %v529, %v545
        %v548 = vor.u32 %v546, %v547
        %v549 = vsub.s32 4294967266, %v544
        %v550 = vadd.s32 %v549, 127
        %v551 = vshll.u32 %v550, 23
        %v552 = vor.u32 4788187, %v551
        %v553 = vand.u32 2147483647, %v552
        %v555 = vcvt.s32.f32 %v548
        %v556 = vmul.f32 %v555, %v553
        %v557 = vxor.u32 %v556, 2147483648
        %v558 = vsel %vm437, %v557, %v556
        %v559 = vsub.s32 4, %v535
        %v560 = vsel %vm437, %v559, %v535
        %v561 = vsel %vm436, %v278, %v558
        %v562 = vsel %vm436, 0, %v560
        %v563 = vmul.f32 %v561, %v561
        %v564 = vmul.f32 %v563, -0.001358992
        %v565 = vadd.f32 %v564, 0.041655596
        %v566 = vmul.f32 %v563, %v565
        %v567 = vadd.f32 %v566, -0.4999988
        %v568 = vmul.f32 %v563, %v567
        %v569 = vadd.f32 1.0, %v568
        %v570 = vmul.f32 %v561, %v561
        %v571 = vmul.f32 %v570, -0.00019511016
        %v572 = vadd.f32 %v571, 0.008332121
        %v573 = vmul.f32 %v570, %v572
        %v574 = vadd.f32 %v573, -0.16666654
        %v575 = vmul.f32 %v570, %v574
        %v576 = vadd.f32 %v575, 1.0
        %v577 = vmul.f32 %v576, %v561
        %vm578 = vweird.f32 %v278
        %v579 = vadd.s32 %v562, 3
        %v580 = vand.u32 %v579, 3
        %vm581 = vcmp.lt.s32.totalorder %v580, 2
        %vm582 = vcmp.eq.s32.totalorder %v580, 0
        %v583 = vxor.u32 %v577, 2147483648
        %v584 = vsel %vm582, %v569, %v583
        %vm585 = vcmp.eq.s32.totalorder %v580, 2
        %v586 = vxor.u32 %v569, 2147483648
        %v587 = vsel %vm585, %v586, %v577
        %v588 = vsel %vm581, %v584, %v587
        %v589 = vsel %vm578, nan, %v588
        %v590 = vld [vmem:[%s4] sm:$0xf]
        %vm591 = vcmask 31744
        %v593 = vsel %vm591, %v589, 0
        %vm595 = vcmask 1043456
        %v597 = vsel %vm595, %v590, 0
        %599 = vmatpush.msra.mxu0 0.0
        %600 = vmatpush.msra.mxu0 0.0
        %601 = vmatpush.msra.mxu0 0.0
        %602 = vmatpush.msra.mxu0 0.0
        %603 = vmatpush.msra.mxu0 0.0
        %604 = vmatpush.msra.mxu0 0.0
        %605 = vmatpush.msra.mxu0 0.0
        %606 = vmatpush.msra.mxu0 0.0
        %607 = vmatpush.msra.mxu0 0.0
        %608 = vmatpush.msra.mxu0 0.0
        %609 = vmatpush.msra.mxu0 0.0
        %610 = vmatpush.msra.mxu0 0.0
        %611 = vmatpush.msra.mxu0 0.0
        %612 = vmatpush.msra.mxu0 0.0
        %613 = vmatpush.msra.mxu0 0.0
        %614 = vmatpush.msra.mxu0 %v597
        %615 = vmatmul.f32.gmra.mxu0 %v593
        %v616 = vpop.f32.mrf.mxu0
        %v617 = vadd.f32 0.0, %v616
        %618 = vdwg.mxu0
        %v620 = vsel %vm591, %v433, 0
        %v623 = vsel %vm595, %v434, 0
        %625 = vmatpush.msra.mxu0 0.0
        %626 = vmatpush.msra.mxu0 0.0
        %627 = vmatpush.msra.mxu0 0.0
        %628 = vmatpush.msra.mxu0 0.0
        %629 = vmatpush.msra.mxu0 0.0
        %630 = vmatpush.msra.mxu0 0.0
        %631 = vmatpush.msra.mxu0 0.0
        %632 = vmatpush.msra.mxu0 0.0
        %633 = vmatpush.msra.mxu0 0.0
        %634 = vmatpush.msra.mxu0 0.0
        %635 = vmatpush.msra.mxu0 0.0
        %636 = vmatpush.msra.mxu0 0.0
        %637 = vmatpush.msra.mxu0 0.0
        %638 = vmatpush.msra.mxu0 0.0
        %639 = vmatpush.msra.mxu0 0.0
        %640 = vmatpush.msra.mxu0 %v623
        %641 = vmatmul.f32.gmra.mxu0 %v620
        %v642 = vpop.f32.mrf.mxu0
        %v643 = vadd.f32 %v617, %v642
        %644 = vdwg.mxu0
        %v645 = vld [vmem:[%s5] sm:$0x1]
        %v647 = vperm.slane %v645, 0
        %v649 = vadd.f32 %v643, %v647
        %650 = vst.msk [vmem:[%s242] sm:$0xff] %vm256, %v649
        %s651 = sand.u32 %s159, 1
        %s652 = scalar_lea.sflag [#allocation3], %s651
        %s653 = sand.u32 %s159, 1
        %s654 = smul.addr %s653, 8
        %s655 = scalar_lea.vmem [#allocation2], %s654
        // Predicated region
        $region45: #{toroidal_layer.1} parent=43 // pred_check
          %p656 = pneg %p169
        $region46: #{toroidal_layer.1} parent=43 // pred_check_branch
          %658 = sbr.rel (%p656) target = $region48
        $region47: #{toroidal_layer.1} parent=43 // pred_region
          %660 = vsyncadd %s652, 0
          %s661 = smul.addr %s20, 8
          %s662 = scalar_lea.hbm %s6, %s661
          %s664 = sshll.u32 %s655, 4
          %s665 = int_to_ptr.vmem [resolvable:$true] %s664
          %s666 = sshll.u32 %s662, 4
          %s667 = int_to_ptr.hbm [resolvable:$true] %s666
          %669 = dma.vmem_to_hbm [thread:$0]  %s665, 128, %s667, %s652
        $region48: #{toroidal_layer.1} parent=43 // pred_fallthru
          _
      $region44: #{toroidal_layer.1} parent=5 // pred_fallthru
        _
      %p670 = scmp.le.s32.totalorder 2, %s15
      // Predicated region
      $region49: #{toroidal_layer.1} parent=5 // pred_check
        %p671 = pneg %p670
      $region50: #{toroidal_layer.1} parent=5 // pred_check_branch
        %673 = sbr.rel (%p671) target = $region52
      $region51: #{toroidal_layer.1} parent=5 // pred_region
        %s674 = ssub.s32 %s15, 2
        // Predicated region
        $region53: #{toroidal_layer.1} parent=51 // pred_check
          %p675 = pneg %p175
        $region54: #{toroidal_layer.1} parent=51 // pred_check_branch
          %677 = sbr.rel (%p675) target = $region56
        $region55: #{toroidal_layer.1} parent=51 // pred_region
          %s678 = sand.u32 %s160, 1
          %s679 = scalar_lea.sflag [#allocation3], %s678
          %s680 = sand.u32 %s160, 1
          %s681 = smul.addr %s680, 8
          %s682 = scalar_lea.vmem [#allocation2], %s681
          %684 = dma.done %s679, 128
        $region56: #{toroidal_layer.1} parent=51 // pred_fallthru
          _
      $region52: #{toroidal_layer.1} parent=5 // pred_fallthru
        _
    $region6: #{toroidal_layer.1} parent=1 // loop_footer
      %s19 = sadd.s32 1, %s15
    $region7: #{toroidal_layer.1} parent=1 // loop_footer_branch
      %14 = sbr.rel target = $region3
    $region8: #{toroidal_layer.1} parent=1 // loop_exit
      _
    %685 = vsyncpa [#allocation3], 1
    %s686 = scalar_lea.sflag [#allocation3], 1
    %687 = vsyncpa %s686, 1

</llo_original>
